<compile_context>
chip_gen: v7x
topology: tpu7x:2x2x1
jax: 0.10.0
libtpu: 0.0.40
codegen_flags: <defaults>
</compile_context>

<pallas_src>
import jax
import jax.numpy as jnp
from jax.experimental import pallas as pl
from jax.experimental.pallas import tpu as pltpu

STATE_IN = 512    # literal forward applies shared_fc2 (512-in) directly to x
SHARED_W = 256    # shared_fc2 output width
HEAD_HID = 128    # each head's fc1 hidden width
OUT_W = 128       # packed output lane width (one full vreg lane tile)


def _round_up(n, m):
    return ((n + m - 1) // m) * m


def make_actor_kernel(num_slots, num_subchannels):
    """Kernel closure; num_slots / num_subchannels are compile-time constants."""

    def actor_kernel(x_ref, wsh_ref, bsh_ref, wh1_ref, bh1_ref, wh2_ref,
                     bh2_ref, o_ref):
        # Cast x to bf16 in-kernel (VPU slot is free); MXU matmuls run bf16
        # with f32 accumulation.  Wrapper-side casting would double x traffic.
        x = x_ref[...].astype(jnp.bfloat16)

        # shared = relu(shared_fc2(x))  -- literal forward; shared_fc1 is dead code
        shared = jnp.dot(x, wsh_ref[...], preferred_element_type=jnp.float32)
        shared = jnp.maximum(shared + bsh_ref[...], 0.0)
        # TODO(synk): nn.Dropout(0.1) is identity in eval mode; training-mode
        # dropout (pltpu.prng_random_bits mask + 1/(1-p) rescale) not implemented.

        # fused head fc1: [slot_fc1 | subchannel_fc1]  ->  [TB, 256]
        feat = jnp.dot(shared.astype(jnp.bfloat16), wh1_ref[...],
                       preferred_element_type=jnp.float32)
        feat = jnp.maximum(feat + bh1_ref[...], 0.0)

        # fused head fc2 packed into 128 output lanes:
        #   rows   0:128 x cols [0, num_slots)                      -> slot logits
        #   rows 128:256 x cols [num_slots, num_slots+num_sub)      -> subchannel logits
        logits = jnp.dot(feat.astype(jnp.bfloat16), wh2_ref[...],
                         preferred_element_type=jnp.float32) + bh2_ref[...]

        lane = jax.lax.broadcasted_iota(jnp.int32, (1, OUT_W), 1)
        slot_mask = lane < num_slots
        sub_mask = (lane >= num_slots) & (lane < num_slots + num_subchannels)

        def masked_softmax(l, mask):
            l = jnp.where(mask, l, jnp.float32(-1e30))
            m = jnp.max(l, axis=-1, keepdims=True)
            e = jnp.where(mask, jnp.exp(l - m), 0.0)
            # exact divide (not approx reciprocal): probs sum to 1 at f32
            # precision for downstream PPO log-prob / entropy.
            return e / jnp.sum(e, axis=-1, keepdims=True)

        # Masks are disjoint -> sum packs both heads into one lane-dense
        # 128-wide tile; single unmasked store, no concatenate temp.
        o_ref[...] = masked_softmax(logits, slot_mask) + masked_softmax(logits, sub_mask)

    return actor_kernel


def separated_actor_forward(x, packed, num_slots, num_subchannels):
    """x: [B, 512] f32 -> (slot_probs [B, num_slots], subchannel_probs [B, num_subchannels])."""
    w_sh, b_sh, w_h1, b_h1, w_h2, b_h2 = packed
    B, D = x.shape
    assert D == STATE_IN, "literal forward applies shared_fc2 (512-in) directly to x"
    assert num_slots + num_subchannels <= OUT_W

    # Batch tile: this kernel is HBM / per-step-overhead bound on every TPU
    # generation, so bigger tiles win (measured 256 -> ~63% of HBM roofline,
    # 512-1024 -> ~85%).  Footprint at TB=1024 is ~14 MiB, well inside even
    # v7x's 64 MiB physical VMEM.
    if B >= 2048:
        TB = 1024
    elif B >= 512:
        TB = 512
    elif B >= 256:
        TB = 256
    else:
        TB = _round_up(B, 8)
    B_pad = _round_up(B, TB)
    # v7x has 2 TensorCores: never collapse to a single grid step when the
    # tile can legally be halved (halves must stay 8-sublane aligned).
    if B_pad // TB == 1 and TB % 16 == 0:
        TB //= 2

    if B_pad != B:
        x = jnp.pad(x, ((0, B_pad - B), (0, 0)))

    grid = (B_pad // TB,)
    # Constant index_map: weights/biases stay VMEM-resident across grid steps.
    resident = lambda a: pl.BlockSpec(a.shape, lambda i: (0, 0))

    # VMEM accounting (no extra global multiplier: double buffers and f32
    # intermediates are already counted explicitly).
    w_hbm_bytes = ((w_sh.size + w_h1.size + w_h2.size) * 2
                   + (b_sh.size + b_h1.size + b_h2.size) * 4)
    vmem_bytes = (2 * TB * D * 4            # double-buffered f32 x tile
                  + 2 * TB * OUT_W * 4      # double-buffered f32 output tile
                  + 2 * w_hbm_bytes         # weights/biases (default double buffer)
                  + 6 * TB * SHARED_W * 4)  # f32 intermediates headroom
    vmem_limit = int(min(48 << 20, _round_up(vmem_bytes + (2 << 20), 1 << 20)))

    flops = 2 * B_pad * (D * SHARED_W + SHARED_W * 2 * HEAD_HID + 2 * HEAD_HID * OUT_W)
    bytes_accessed = B_pad * D * 4 + w_hbm_bytes + B_pad * OUT_W * 4

    out = pl.pallas_call(
        make_actor_kernel(num_slots, num_subchannels),
        grid=grid,
        in_specs=[pl.BlockSpec((TB, D), lambda i: (i, 0)),
                  resident(w_sh), resident(b_sh),
                  resident(w_h1), resident(b_h1),
                  resident(w_h2), resident(b_h2)],
        out_specs=pl.BlockSpec((TB, OUT_W), lambda i: (i, 0)),
        out_shape=jax.ShapeDtypeStruct((B_pad, OUT_W), jnp.float32),
        compiler_params=pltpu.CompilerParams(
            dimension_semantics=("parallel",),
            vmem_limit_bytes=vmem_limit),
        cost_estimate=pl.CostEstimate(
            flops=flops,
            transcendentals=2 * B_pad * OUT_W,
            bytes_accessed=bytes_accessed),
    )(x, w_sh, b_sh, w_h1, b_h1, w_h2, b_h2)

    slot_probs = out[:B, :num_slots]
    sub_probs = out[:B, num_slots:num_slots + num_subchannels]
    return slot_probs, sub_probs


def init_params(key, state_dim, num_slots, num_subchannels):
    """Deterministic synthetic weights matching nn.Linear shapes (stored as [in, out])."""
    dims = [("shared_fc1", state_dim, 512), ("shared_fc2", 512, SHARED_W),
            ("slot_fc1", SHARED_W, HEAD_HID), ("slot_fc2", HEAD_HID, num_slots),
            ("subchannel_fc1", SHARED_W, HEAD_HID),
            ("subchannel_fc2", HEAD_HID, num_subchannels)]
    params = {}
    for i, (name, din, dout) in enumerate(dims):
        kw, kb = jax.random.split(jax.random.fold_in(key, i))
        bound = 1.0 / jnp.sqrt(float(din))  # PyTorch default init scale
        params[name] = (
            jax.random.uniform(kw, (din, dout), jnp.float32, -bound, bound),
            jax.random.uniform(kb, (1, dout), jnp.float32, -bound, bound))
    return params


def pack_params(params, num_slots, num_subchannels):
    """Pack module params into the fused / packed bf16 layout the kernel expects."""
    assert num_slots + num_subchannels <= OUT_W
    # shared_fc1 is unused by the reference forward (its output is overwritten).
    w_sh, b_sh = params["shared_fc2"]
    w_s1, b_s1 = params["slot_fc1"]
    w_s2, b_s2 = params["slot_fc2"]
    w_c1, b_c1 = params["subchannel_fc1"]
    w_c2, b_c2 = params["subchannel_fc2"]

    w_h1 = jnp.concatenate([w_s1, w_c1], axis=1)                 # [256, 256]
    b_h1 = jnp.concatenate([b_s1, b_c1], axis=1)                 # [1, 256]

    # Head fc2 packed into a single 128-lane output tile (block structure in K):
    #   slot logits    -> lanes [0, num_slots)
    #   subchan logits -> lanes [num_slots, num_slots + num_subchannels)
    w_h2 = jnp.zeros((2 * HEAD_HID, OUT_W), jnp.float32)
    w_h2 = w_h2.at[:HEAD_HID, :num_slots].set(w_s2)
    w_h2 = w_h2.at[HEAD_HID:, num_slots:num_slots + num_subchannels].set(w_c2)
    b_h2 = jnp.zeros((1, OUT_W), jnp.float32)
    b_h2 = b_h2.at[:, :num_slots].set(b_s2)
    b_h2 = b_h2.at[:, num_slots:num_slots + num_subchannels].set(b_c2)

    bf16 = jnp.bfloat16
    return (w_sh.astype(bf16), b_sh,
            w_h1.astype(bf16), b_h1,
            w_h2.astype(bf16), b_h2)


def actor_reference(x, params):
    """Pure-JAX mirror of the literal PyTorch forward (shared_fc1 discarded),
    with the same bf16 weight/activation quantization + f32 accumulation."""
    bf16 = jnp.bfloat16
    w_sh, b_sh = params["shared_fc2"]
    w_s1, b_s1 = params["slot_fc1"]
    w_s2, b_s2 = params["slot_fc2"]
    w_c1, b_c1 = params["subchannel_fc1"]
    w_c2, b_c2 = params["subchannel_fc2"]

    def lin(h, w, b):
        return jnp.dot(h.astype(bf16), w.astype(bf16),
                       preferred_element_type=jnp.float32) + b

    shared = jnp.maximum(lin(x, w_sh, b_sh), 0.0)
    slot_feat = jnp.maximum(lin(shared, w_s1, b_s1), 0.0)
    sub_feat = jnp.maximum(lin(shared, w_c1, b_c1), 0.0)
    slot_probs = jax.nn.softmax(lin(slot_feat, w_s2, b_s2), axis=-1)
    sub_probs = jax.nn.softmax(lin(sub_feat, w_c2, b_c2), axis=-1)
    return slot_probs, sub_probs


if __name__ == "__main__":
    key = jax.random.PRNGKey(0)
    B, STATE_DIM = 8, 512          # literal forward forces state_dim == 512
    NUM_SLOTS, NUM_SUBCHANNELS = 10, 16

    kx, kp = jax.random.split(key)
    x = jax.random.normal(kx, (B, STATE_DIM), jnp.float32)
    params = init_params(kp, STATE_DIM, NUM_SLOTS, NUM_SUBCHANNELS)
    packed = pack_params(params, NUM_SLOTS, NUM_SUBCHANNELS)

    slot_p, sub_p = separated_actor_forward(x, packed, NUM_SLOTS, NUM_SUBCHANNELS)
    slot_p, sub_p = jax.block_until_ready((slot_p, sub_p))

    ref_slot, ref_sub = actor_reference(x, params)

    assert slot_p.shape == (B, NUM_SLOTS), slot_p.shape
    assert sub_p.shape == (B, NUM_SUBCHANNELS), sub_p.shape
    assert jnp.allclose(slot_p, ref_slot, atol=1e-2, rtol=1e-2), "slot probs mismatch"
    assert jnp.allclose(sub_p, ref_sub, atol=1e-2, rtol=1e-2), "subchannel probs mismatch"
    assert jnp.allclose(slot_p.sum(-1), 1.0, atol=1e-3), "slot probs not normalized"
    assert jnp.allclose(sub_p.sum(-1), 1.0, atol=1e-3), "subchannel probs not normalized"
    print("KERNEL_OK")
</pallas_src>

<mosaic_0001>
module attributes {stable_mosaic.version = 11 : i64} {
  func.func @actor_kernel(%arg0: i32, %arg1: memref<8x512xf32, #tpu.memory_space<vmem>>, %arg2: memref<512x256xbf16, #tpu.memory_space<vmem>>, %arg3: memref<1x256xf32, #tpu.memory_space<vmem>>, %arg4: memref<256x256xbf16, #tpu.memory_space<vmem>>, %arg5: memref<1x256xf32, #tpu.memory_space<vmem>>, %arg6: memref<256x128xbf16, #tpu.memory_space<vmem>>, %arg7: memref<1x128xf32, #tpu.memory_space<vmem>>, %arg8: memref<8x128xf32, #tpu.memory_space<vmem>>) attributes {dimension_semantics = [#tpu.dimension_semantics<parallel>], iteration_bounds = array<i64: 1>, scalar_prefetch = 0 : i64, scratch_operands = 0 : i64, tpu.core_type = #tpu.core_type<tc>, window_params = [{transform_indices = @transform_0, window_bounds = array<i64: 8, 512>}, {pipeline_mode = #tpu.pipeline_mode<synchronous>, transform_indices = @transform_1, window_bounds = array<i64: 512, 256>}, {pipeline_mode = #tpu.pipeline_mode<synchronous>, transform_indices = @transform_2, window_bounds = array<i64: 1, 256>}, {pipeline_mode = #tpu.pipeline_mode<synchronous>, transform_indices = @transform_3, window_bounds = array<i64: 256, 256>}, {pipeline_mode = #tpu.pipeline_mode<synchronous>, transform_indices = @transform_4, window_bounds = array<i64: 1, 256>}, {pipeline_mode = #tpu.pipeline_mode<synchronous>, transform_indices = @transform_5, window_bounds = array<i64: 256, 128>}, {pipeline_mode = #tpu.pipeline_mode<synchronous>, transform_indices = @transform_6, window_bounds = array<i64: 1, 128>}, {transform_indices = @transform_7, window_bounds = array<i64: 8, 128>}]} {
    %c0 = arith.constant 0 : index
    %c0_0 = arith.constant 0 : index
    %0 = vector.load %arg1[%c0, %c0_0] : memref<8x512xf32, #tpu.memory_space<vmem>>, vector<8x512xf32>
    %1 = arith.truncf %0 : vector<8x512xf32> to vector<8x512xbf16>
    %c0_1 = arith.constant 0 : index
    %c0_2 = arith.constant 0 : index
    %2 = vector.load %arg2[%c0_1, %c0_2] : memref<512x256xbf16, #tpu.memory_space<vmem>>, vector<512x256xbf16>
    %cst = arith.constant dense<0.000000e+00> : vector<8x256xf32>
    %3 = tpu.matmul %1, %2, %cst {dimension_numbers = #tpu.dot_dimension_numbers<[1], [0], [0], [1], [0, 0, 1, 1], [], []>} : vector<8x512xbf16>, vector<512x256xbf16>, vector<8x256xf32> -> vector<8x256xf32>
    %c0_3 = arith.constant 0 : index
    %c0_4 = arith.constant 0 : index
    %4 = vector.load %arg3[%c0_3, %c0_4] : memref<1x256xf32, #tpu.memory_space<vmem>>, vector<1x256xf32>
    %5 = vector.broadcast %4 : vector<1x256xf32> to vector<8x256xf32>
    %6 = arith.addf %3, %5 : vector<8x256xf32>
    %cst_5 = arith.constant 0.000000e+00 : f32
    %7 = vector.broadcast %cst_5 : f32 to vector<8x256xf32>
    %8 = arith.maximumf %6, %7 : vector<8x256xf32>
    %9 = arith.truncf %8 : vector<8x256xf32> to vector<8x256xbf16>
    %c0_6 = arith.constant 0 : index
    %c0_7 = arith.constant 0 : index
    %10 = vector.load %arg4[%c0_6, %c0_7] : memref<256x256xbf16, #tpu.memory_space<vmem>>, vector<256x256xbf16>
    %cst_8 = arith.constant dense<0.000000e+00> : vector<8x256xf32>
    %11 = tpu.matmul %9, %10, %cst_8 {dimension_numbers = #tpu.dot_dimension_numbers<[1], [0], [0], [1], [0, 0, 1, 1], [], []>} : vector<8x256xbf16>, vector<256x256xbf16>, vector<8x256xf32> -> vector<8x256xf32>
    %c0_9 = arith.constant 0 : index
    %c0_10 = arith.constant 0 : index
    %12 = vector.load %arg5[%c0_9, %c0_10] : memref<1x256xf32, #tpu.memory_space<vmem>>, vector<1x256xf32>
    %13 = vector.broadcast %12 : vector<1x256xf32> to vector<8x256xf32>
    %14 = arith.addf %11, %13 : vector<8x256xf32>
    %cst_11 = arith.constant 0.000000e+00 : f32
    %15 = vector.broadcast %cst_11 : f32 to vector<8x256xf32>
    %16 = arith.maximumf %14, %15 : vector<8x256xf32>
    %17 = arith.truncf %16 : vector<8x256xf32> to vector<8x256xbf16>
    %c0_12 = arith.constant 0 : index
    %c0_13 = arith.constant 0 : index
    %18 = vector.load %arg6[%c0_12, %c0_13] : memref<256x128xbf16, #tpu.memory_space<vmem>>, vector<256x128xbf16>
    %cst_14 = arith.constant dense<0.000000e+00> : vector<8x128xf32>
    %19 = tpu.matmul %17, %18, %cst_14 {dimension_numbers = #tpu.dot_dimension_numbers<[1], [0], [0], [1], [0, 0, 1, 1], [], []>} : vector<8x256xbf16>, vector<256x128xbf16>, vector<8x128xf32> -> vector<8x128xf32>
    %c0_15 = arith.constant 0 : index
    %c0_16 = arith.constant 0 : index
    %20 = vector.load %arg7[%c0_15, %c0_16] : memref<1x128xf32, #tpu.memory_space<vmem>>, vector<1x128xf32>
    %21 = vector.broadcast %20 : vector<1x128xf32> to vector<8x128xf32>
    %22 = arith.addf %19, %21 : vector<8x128xf32>
    %23 = tpu.iota {dimensions = array<i32: 1>} : vector<1x128xi32>
    %c10_i32 = arith.constant 10 : i32
    %24 = vector.broadcast %c10_i32 : i32 to vector<1x128xi32>
    %25 = arith.cmpi slt, %23, %24 : vector<1x128xi32>
    %c10_i32_17 = arith.constant 10 : i32
    %26 = vector.broadcast %c10_i32_17 : i32 to vector<1x128xi32>
    %27 = arith.cmpi sge, %23, %26 : vector<1x128xi32>
    %c26_i32 = arith.constant 26 : i32
    %28 = vector.broadcast %c26_i32 : i32 to vector<1x128xi32>
    %29 = arith.cmpi slt, %23, %28 : vector<1x128xi32>
    %30 = arith.andi %27, %29 : vector<1x128xi1>
    %cst_18 = arith.constant -1.000000e+30 : f32
    %31 = vector.shape_cast %25 : vector<1x128xi1> to vector<1x128xi1>
    %32 = vector.broadcast %31 : vector<1x128xi1> to vector<8x128xi1>
    %33 = vector.broadcast %cst_18 : f32 to vector<8x128xf32>
    %34 = arith.select %32, %22, %33 : vector<8x128xi1>, vector<8x128xf32>
    %cst_19 = arith.constant dense<0xFF800000> : vector<8xf32>
    %35 = vector.multi_reduction <maximumf>, %34, %cst_19 [1] : vector<8x128xf32> to vector<8xf32>
    %36 = vector.shape_cast %35 : vector<8xf32> to vector<8x1xf32>
    %37 = vector.broadcast %36 : vector<8x1xf32> to vector<8x128xf32>
    %38 = arith.subf %34, %37 : vector<8x128xf32>
    %39 = math.exp %38 : vector<8x128xf32>
    %cst_20 = arith.constant 0.000000e+00 : f32
    %40 = vector.shape_cast %25 : vector<1x128xi1> to vector<1x128xi1>
    %41 = vector.broadcast %40 : vector<1x128xi1> to vector<8x128xi1>
    %42 = vector.broadcast %cst_20 : f32 to vector<8x128xf32>
    %43 = arith.select %41, %39, %42 : vector<8x128xi1>, vector<8x128xf32>
    %cst_21 = arith.constant dense<0.000000e+00> : vector<8xf32>
    %44 = vector.multi_reduction <add>, %43, %cst_21 [1] : vector<8x128xf32> to vector<8xf32>
    %45 = vector.shape_cast %44 : vector<8xf32> to vector<8x1xf32>
    %46 = vector.broadcast %45 : vector<8x1xf32> to vector<8x128xf32>
    %47 = arith.divf %43, %46 : vector<8x128xf32>
    %cst_22 = arith.constant -1.000000e+30 : f32
    %48 = vector.shape_cast %30 : vector<1x128xi1> to vector<1x128xi1>
    %49 = vector.broadcast %48 : vector<1x128xi1> to vector<8x128xi1>
    %50 = vector.broadcast %cst_22 : f32 to vector<8x128xf32>
    %51 = arith.select %49, %22, %50 : vector<8x128xi1>, vector<8x128xf32>
    %cst_23 = arith.constant dense<0xFF800000> : vector<8xf32>
    %52 = vector.multi_reduction <maximumf>, %51, %cst_23 [1] : vector<8x128xf32> to vector<8xf32>
    %53 = vector.shape_cast %52 : vector<8xf32> to vector<8x1xf32>
    %54 = vector.broadcast %53 : vector<8x1xf32> to vector<8x128xf32>
    %55 = arith.subf %51, %54 : vector<8x128xf32>
    %56 = math.exp %55 : vector<8x128xf32>
    %cst_24 = arith.constant 0.000000e+00 : f32
    %57 = vector.shape_cast %30 : vector<1x128xi1> to vector<1x128xi1>
    %58 = vector.broadcast %57 : vector<1x128xi1> to vector<8x128xi1>
    %59 = vector.broadcast %cst_24 : f32 to vector<8x128xf32>
    %60 = arith.select %58, %56, %59 : vector<8x128xi1>, vector<8x128xf32>
    %cst_25 = arith.constant dense<0.000000e+00> : vector<8xf32>
    %61 = vector.multi_reduction <add>, %60, %cst_25 [1] : vector<8x128xf32> to vector<8xf32>
    %62 = vector.shape_cast %61 : vector<8xf32> to vector<8x1xf32>
    %63 = vector.broadcast %62 : vector<8x1xf32> to vector<8x128xf32>
    %64 = arith.divf %60, %63 : vector<8x128xf32>
    %65 = arith.addf %47, %64 : vector<8x128xf32>
    %c0_26 = arith.constant 0 : index
    %c0_27 = arith.constant 0 : index
    %66 = vector.load %arg8[%c0_26, %c0_27] : memref<8x128xf32, #tpu.memory_space<vmem>>, vector<8x128xf32>
    tpu.vector_store %arg8[%c0_26, %c0_27], %65 {strides = array<i32>} : memref<8x128xf32, #tpu.memory_space<vmem>>, vector<8x128xf32>,
    return
  }
  func.func @transform_0(%arg0: i32) -> (i32, i32) {
    %c0_i32 = arith.constant 0 : i32
    %c0_i32_0 = arith.constant 0 : i32
    return %arg0, %c0_i32 : i32, i32
  }
  func.func @transform_1(%arg0: i32) -> (i32, i32) {
    %c0_i32 = arith.constant 0 : i32
    %c0_i32_0 = arith.constant 0 : i32
    %c0_i32_1 = arith.constant 0 : i32
    return %c0_i32, %c0_i32_0 : i32, i32
  }
  func.func @transform_2(%arg0: i32) -> (i32, i32) {
    %c0_i32 = arith.constant 0 : i32
    %c0_i32_0 = arith.constant 0 : i32
    %c0_i32_1 = arith.constant 0 : i32
    return %c0_i32, %c0_i32_0 : i32, i32
  }
  func.func @transform_3(%arg0: i32) -> (i32, i32) {
    %c0_i32 = arith.constant 0 : i32
    %c0_i32_0 = arith.constant 0 : i32
    %c0_i32_1 = arith.constant 0 : i32
    return %c0_i32, %c0_i32_0 : i32, i32
  }
  func.func @transform_4(%arg0: i32) -> (i32, i32) {
    %c0_i32 = arith.constant 0 : i32
    %c0_i32_0 = arith.constant 0 : i32
    %c0_i32_1 = arith.constant 0 : i32
    return %c0_i32, %c0_i32_0 : i32, i32
  }
  func.func @transform_5(%arg0: i32) -> (i32, i32) {
    %c0_i32 = arith.constant 0 : i32
    %c0_i32_0 = arith.constant 0 : i32
    %c0_i32_1 = arith.constant 0 : i32
    return %c0_i32, %c0_i32_0 : i32, i32
  }
  func.func @transform_6(%arg0: i32) -> (i32, i32) {
    %c0_i32 = arith.constant 0 : i32
    %c0_i32_0 = arith.constant 0 : i32
    %c0_i32_1 = arith.constant 0 : i32
    return %c0_i32, %c0_i32_0 : i32, i32
  }
  func.func @transform_7(%arg0: i32) -> (i32, i32) {
    %c0_i32 = arith.constant 0 : i32
    %c0_i32_0 = arith.constant 0 : i32
    return %arg0, %c0_i32 : i32, i32
  }
}

</mosaic_0001>

<llo_original>
// kernel: tpu_custom_call.1
$region0: #{tpu_custom_call.1}
  #allocation0 [shape = 'u32[]', space=smem, size = 0x4, offset = 0x4, fixed_abs, tag = 'smem constant byte address 0x4 - core index']
  #allocation1 [shape = 'u32[144,128]{1,0:T(1,128)}', space=vmem, size = 0x12000, scoped, tag = 'internal scratch']
  %s0 = inlined_call_operand.hbm [shape: f32[8,512], index: 0, kind: input, shape index: {}]
  %s1 = inlined_call_operand.hbm [shape: bf16[512,256], index: 1, kind: input, shape index: {}]
  %s2 = inlined_call_operand.vmem [shape: f32[1,256], index: 2, kind: input, shape index: {}]
  %s3 = inlined_call_operand.hbm [shape: bf16[256,256], index: 3, kind: input, shape index: {}]
  %s4 = inlined_call_operand.vmem [shape: f32[1,256], index: 4, kind: input, shape index: {}]
  %s5 = inlined_call_operand.hbm [shape: bf16[256,128], index: 5, kind: input, shape index: {}]
  %s6 = inlined_call_operand.vmem [shape: f32[1,128], index: 6, kind: input, shape index: {}]
  %s7 = inlined_call_operand.hbm [shape: f32[8,128], index: 7, kind: output, shape index: {}]
  %s8 = sld [smem:[#allocation0]]
  $region54: #{tpu_custom_call.1} parent=0
    _
  %s10 = ssub.s32 1, %s8
  %s11 = scalar_select 0, %s10, %s8
  $region1: #{tpu_custom_call.1} parent=0
    #allocation2 [shape = 'u8[16384]{0}', space=vmem, size = 0x4000, scoped, tag = 'input window, operand 0, single buffered']
    #allocation3 [shape = 's32[1]{0}', space=sflag, size = 0x4, scoped, tag = 'scoped memory for tpu_custom_call.1']
    #allocation4 [shape = 's32[1]{0}', space=sflag, size = 0x4, scoped, tag = 'scoped memory for tpu_custom_call.1']
    #allocation5 [shape = 'u8[262144]{0}', space=vmem, size = 0x40000, scoped, tag = 'input window, operand 1, single buffered']
    #allocation6 [shape = 's32[1]{0}', space=sflag, size = 0x4, scoped, tag = 'scoped memory for tpu_custom_call.1']
    #allocation7 [shape = 'u8[131072]{0}', space=vmem, size = 0x20000, scoped, tag = 'input window, operand 3, single buffered']
    #allocation8 [shape = 'u8[65536]{0}', space=vmem, size = 0x10000, scoped, tag = 'input window, operand 5, single buffered']
    #allocation9 [shape = 's32[1]{0}', space=sflag, size = 0x4, scoped, tag = 'scoped memory for tpu_custom_call.1']
    #allocation10 [shape = 'u8[4096]{0}', space=vmem, size = 0x1000, scoped, tag = 'output window, operand 0, single buffered']
    %12 = vsyncpa [#allocation3], 0
    %13 = vsyncpa [#allocation6], 0
    %14 = vsyncpa [#allocation9], 0
    %15 = vsyncpa [#allocation4], 0
    // Predicated region
    $region2: #{tpu_custom_call.1} parent=1 // pred_check
      _
    $region3: #{tpu_custom_call.1} parent=1 // pred_check_branch
      %17 = sbr.rel (0) target = $region5
    $region4: #{tpu_custom_call.1} parent=1 // pred_region
      %s19 = ssub.s32 512, 512
      %20 = vsyncadd [#allocation3], %s19
      %s22 = sshll.u32 [#allocation2], 4
      %s23 = int_to_ptr.vmem [resolvable:$true] %s22
      %25 = dma.hbm_to_vmem [thread:$0]  %s0, 512, %s23, [#allocation3]
    $region5: #{tpu_custom_call.1} parent=1 // pred_fallthru
      _
    // Predicated region
    $region6: #{tpu_custom_call.1} parent=1 // pred_check
      _
    $region7: #{tpu_custom_call.1} parent=1 // pred_check_branch
      %27 = sbr.rel (0) target = $region9
    $region8: #{tpu_custom_call.1} parent=1 // pred_region
      %s29 = ssub.s32 8192, 8192
      %30 = vsyncadd [#allocation6], %s29
      %s31 = sshll.u32 [#allocation5], 4
      %s32 = int_to_ptr.vmem [resolvable:$true] %s31
      %37 = dma.hbm_to_vmem [thread:$0]  %s1, 8192, %s32, [#allocation6], 128, 128, 8
    $region9: #{tpu_custom_call.1} parent=1 // pred_fallthru
      _
    // Predicated region
    $region10: #{tpu_custom_call.1} parent=1 // pred_check
      _
    $region11: #{tpu_custom_call.1} parent=1 // pred_check_branch
      %39 = sbr.rel (0) target = $region13
    $region12: #{tpu_custom_call.1} parent=1 // pred_region
      _
    $region13: #{tpu_custom_call.1} parent=1 // pred_fallthru
      _
    // Predicated region
    $region14: #{tpu_custom_call.1} parent=1 // pred_check
      _
    $region15: #{tpu_custom_call.1} parent=1 // pred_check_branch
      %41 = sbr.rel (0) target = $region17
    $region16: #{tpu_custom_call.1} parent=1 // pred_region
      %s43 = ssub.s32 4096, 4096
      %44 = vsyncadd [#allocation6], %s43
      %s45 = sshll.u32 [#allocation7], 4
      %s46 = int_to_ptr.vmem [resolvable:$true] %s45
      %51 = dma.hbm_to_vmem [thread:$0]  %s3, 4096, %s46, [#allocation6], 128, 128, 8
    $region17: #{tpu_custom_call.1} parent=1 // pred_fallthru
      _
    // Predicated region
    $region18: #{tpu_custom_call.1} parent=1 // pred_check
      _
    $region19: #{tpu_custom_call.1} parent=1 // pred_check_branch
      %53 = sbr.rel (0) target = $region21
    $region20: #{tpu_custom_call.1} parent=1 // pred_region
      _
    $region21: #{tpu_custom_call.1} parent=1 // pred_fallthru
      _
    // Predicated region
    $region22: #{tpu_custom_call.1} parent=1 // pred_check
      _
    $region23: #{tpu_custom_call.1} parent=1 // pred_check_branch
      %55 = sbr.rel (0) target = $region25
    $region24: #{tpu_custom_call.1} parent=1 // pred_region
      %s57 = ssub.s32 2048, 2048
      %58 = vsyncadd [#allocation9], %s57
      %s59 = sshll.u32 [#allocation8], 4
      %s60 = int_to_ptr.vmem [resolvable:$true] %s59
      %65 = dma.hbm_to_vmem [thread:$0]  %s5, 2048, %s60, [#allocation9], 64, 64, 4
    $region25: #{tpu_custom_call.1} parent=1 // pred_fallthru
      _
    // Predicated region
    $region26: #{tpu_custom_call.1} parent=1 // pred_check
      _
    $region27: #{tpu_custom_call.1} parent=1 // pred_check_branch
      %67 = sbr.rel (0) target = $region29
    $region28: #{tpu_custom_call.1} parent=1 // pred_region
      _
    $region29: #{tpu_custom_call.1} parent=1 // pred_fallthru
      _
    // Predicated region
    $region30: #{tpu_custom_call.1} parent=1 // pred_check
      _
    $region31: #{tpu_custom_call.1} parent=1 // pred_check_branch
      %69 = sbr.rel (0) target = $region33
    $region32: #{tpu_custom_call.1} parent=1 // pred_region
      %70 = dma.done [#allocation3], 512
    $region33: #{tpu_custom_call.1} parent=1 // pred_fallthru
      _
    // Predicated region
    $region34: #{tpu_custom_call.1} parent=1 // pred_check
      _
    $region35: #{tpu_custom_call.1} parent=1 // pred_check_branch
      %72 = sbr.rel (0) target = $region37
    $region36: #{tpu_custom_call.1} parent=1 // pred_region
      %73 = dma.done [#allocation6], 8192
    $region37: #{tpu_custom_call.1} parent=1 // pred_fallthru
      _
    // Predicated region
    $region38: #{tpu_custom_call.1} parent=1 // pred_check
      _
    $region39: #{tpu_custom_call.1} parent=1 // pred_check_branch
      %75 = sbr.rel (0) target = $region41
    $region40: #{tpu_custom_call.1} parent=1 // pred_region
      %76 = dma.done [#allocation6], 4096
    $region41: #{tpu_custom_call.1} parent=1 // pred_fallthru
      _
    // Predicated region
    $region42: #{tpu_custom_call.1} parent=1 // pred_check
      _
    $region43: #{tpu_custom_call.1} parent=1 // pred_check_branch
      %78 = sbr.rel (0) target = $region45
    $region44: #{tpu_custom_call.1} parent=1 // pred_region
      %79 = dma.done [#allocation9], 2048
    $region45: #{tpu_custom_call.1} parent=1 // pred_fallthru
      _
    %v81 = vld [vmem:[#allocation2] sm:$0xff]
    %v82 = vld [vmem:[#allocation2 + $0x8] sm:$0xff]
    %v83 = vld [vmem:[#allocation2 + $0x10] sm:$0xff]
    %v84 = vld [vmem:[#allocation2 + $0x18] sm:$0xff]
    %v85 = vpack.c.bf16 %v81, %v81
    %v86 = vpack.c.bf16 %v82, %v82
    %v87 = vpack.c.bf16 %v83, %v83
    %v88 = vpack.c.bf16 %v84, %v84
    %v89 = vld [vmem:[#allocation5] sm:$0xff]
    %v90 = vld [vmem:[#allocation5 + $0x8] sm:$0xff]
    %v91 = vld [vmem:[#allocation5 + $0x10] sm:$0xff]
    %v92 = vld [vmem:[#allocation5 + $0x18] sm:$0xff]
    %v93 = vld [vmem:[#allocation5 + $0x20] sm:$0xff]
    %v94 = vld [vmem:[#allocation5 + $0x28] sm:$0xff]
    %v95 = vld [vmem:[#allocation5 + $0x30] sm:$0xff]
    %v96 = vld [vmem:[#allocation5 + $0x38] sm:$0xff]
    %v97 = vld [vmem:[#allocation5 + $0x40] sm:$0xff]
    %v98 = vld [vmem:[#allocation5 + $0x48] sm:$0xff]
    %v99 = vld [vmem:[#allocation5 + $0x50] sm:$0xff]
    %v100 = vld [vmem:[#allocation5 + $0x58] sm:$0xff]
    %v101 = vld [vmem:[#allocation5 + $0x60] sm:$0xff]
    %v102 = vld [vmem:[#allocation5 + $0x68] sm:$0xff]
    %v103 = vld [vmem:[#allocation5 + $0x70] sm:$0xff]
    %v104 = vld [vmem:[#allocation5 + $0x78] sm:$0xff]
    %v105 = vld [vmem:[#allocation5 + $0x80] sm:$0xff]
    %v106 = vld [vmem:[#allocation5 + $0x88] sm:$0xff]
    %v107 = vld [vmem:[#allocation5 + $0x90] sm:$0xff]
    %v108 = vld [vmem:[#allocation5 + $0x98] sm:$0xff]
    %v109 = vld [vmem:[#allocation5 + $0xa0] sm:$0xff]
    %v110 = vld [vmem:[#allocation5 + $0xa8] sm:$0xff]
    %v111 = vld [vmem:[#allocation5 + $0xb0] sm:$0xff]
    %v112 = vld [vmem:[#allocation5 + $0xb8] sm:$0xff]
    %v113 = vld [vmem:[#allocation5 + $0xc0] sm:$0xff]
    %v114 = vld [vmem:[#allocation5 + $0xc8] sm:$0xff]
    %v115 = vld [vmem:[#allocation5 + $0xd0] sm:$0xff]
    %v116 = vld [vmem:[#allocation5 + $0xd8] sm:$0xff]
    %v117 = vld [vmem:[#allocation5 + $0xe0] sm:$0xff]
    %v118 = vld [vmem:[#allocation5 + $0xe8] sm:$0xff]
    %v119 = vld [vmem:[#allocation5 + $0xf0] sm:$0xff]
    %v120 = vld [vmem:[#allocation5 + $0xf8] sm:$0xff]
    %v121 = vld [vmem:[#allocation5 + $0x100] sm:$0xff]
    %v122 = vld [vmem:[#allocation5 + $0x108] sm:$0xff]
    %v123 = vld [vmem:[#allocation5 + $0x110] sm:$0xff]
    %v124 = vld [vmem:[#allocation5 + $0x118] sm:$0xff]
    %v125 = vld [vmem:[#allocation5 + $0x120] sm:$0xff]
    %v126 = vld [vmem:[#allocation5 + $0x128] sm:$0xff]
    %v127 = vld [vmem:[#allocation5 + $0x130] sm:$0xff]
    %v128 = vld [vmem:[#allocation5 + $0x138] sm:$0xff]
    %v129 = vld [vmem:[#allocation5 + $0x140] sm:$0xff]
    %v130 = vld [vmem:[#allocation5 + $0x148] sm:$0xff]
    %v131 = vld [vmem:[#allocation5 + $0x150] sm:$0xff]
    %v132 = vld [vmem:[#allocation5 + $0x158] sm:$0xff]
    %v133 = vld [vmem:[#allocation5 + $0x160] sm:$0xff]
    %v134 = vld [vmem:[#allocation5 + $0x168] sm:$0xff]
    %v135 = vld [vmem:[#allocation5 + $0x170] sm:$0xff]
    %v136 = vld [vmem:[#allocation5 + $0x178] sm:$0xff]
    %v137 = vld [vmem:[#allocation5 + $0x180] sm:$0xff]
    %v138 = vld [vmem:[#allocation5 + $0x188] sm:$0xff]
    %v139 = vld [vmem:[#allocation5 + $0x190] sm:$0xff]
    %v140 = vld [vmem:[#allocation5 + $0x198] sm:$0xff]
    %v141 = vld [vmem:[#allocation5 + $0x1a0] sm:$0xff]
    %v142 = vld [vmem:[#allocation5 + $0x1a8] sm:$0xff]
    %v143 = vld [vmem:[#allocation5 + $0x1b0] sm:$0xff]
    %v144 = vld [vmem:[#allocation5 + $0x1b8] sm:$0xff]
    %v145 = vld [vmem:[#allocation5 + $0x1c0] sm:$0xff]
    %v146 = vld [vmem:[#allocation5 + $0x1c8] sm:$0xff]
    %v147 = vld [vmem:[#allocation5 + $0x1d0] sm:$0xff]
    %v148 = vld [vmem:[#allocation5 + $0x1d8] sm:$0xff]
    %v149 = vld [vmem:[#allocation5 + $0x1e0] sm:$0xff]
    %v150 = vld [vmem:[#allocation5 + $0x1e8] sm:$0xff]
    %v151 = vld [vmem:[#allocation5 + $0x1f0] sm:$0xff]
    %v152 = vld [vmem:[#allocation5 + $0x1f8] sm:$0xff]
    %v153 = vld [vmem:[%s2] sm:$0x3]
    %v155 = vlaneseq
    %v156 = vshrl.u32 %v155, 7
    %v157 = vsub.s32 0, %v156
    %v158 = vrot.slane %v153, %v157
    %v159 = vlaneseq
    %v160 = vshrl.u32 %v159, 7
    %v161 = vsub.s32 1, %v160
    %v162 = vrot.slane %v153, %v161
    %v229 = vunpack.c.l.b16 %v89
    %v230 = vunpack.c.h.b16 %v89
    %v231 = vunpack.c.l.b16 %v90
    %v232 = vunpack.c.h.b16 %v90
    %v233 = vunpack.c.l.b16 %v91
    %v234 = vunpack.c.h.b16 %v91
    %v235 = vunpack.c.l.b16 %v92
    %v236 = vunpack.c.h.b16 %v92
    %v237 = vunpack.c.l.b16 %v93
    %v238 = vunpack.c.h.b16 %v93
    %v239 = vunpack.c.l.b16 %v94
    %v240 = vunpack.c.h.b16 %v94
    %v241 = vunpack.c.l.b16 %v95
    %v242 = vunpack.c.h.b16 %v95
    %v243 = vunpack.c.l.b16 %v96
    %v244 = vunpack.c.h.b16 %v96
    %v245 = vunpack.c.l.b16 %v97
    %v246 = vunpack.c.h.b16 %v97
    %v247 = vunpack.c.l.b16 %v98
    %v248 = vunpack.c.h.b16 %v98
    %v249 = vunpack.c.l.b16 %v99
    %v250 = vunpack.c.h.b16 %v99
    %v251 = vunpack.c.l.b16 %v100
    %v252 = vunpack.c.h.b16 %v100
    %v253 = vunpack.c.l.b16 %v101
    %v254 = vunpack.c.h.b16 %v101
    %v255 = vunpack.c.l.b16 %v102
    %v256 = vunpack.c.h.b16 %v102
    %v257 = vunpack.c.l.b16 %v103
    %v258 = vunpack.c.h.b16 %v103
    %v259 = vunpack.c.l.b16 %v104
    %v260 = vunpack.c.h.b16 %v104
    %v261 = vunpack.c.l.b16 %v105
    %v262 = vunpack.c.h.b16 %v105
    %v263 = vunpack.c.l.b16 %v106
    %v264 = vunpack.c.h.b16 %v106
    %v265 = vunpack.c.l.b16 %v107
    %v266 = vunpack.c.h.b16 %v107
    %v267 = vunpack.c.l.b16 %v108
    %v268 = vunpack.c.h.b16 %v108
    %v269 = vunpack.c.l.b16 %v109
    %v270 = vunpack.c.h.b16 %v109
    %v271 = vunpack.c.l.b16 %v110
    %v272 = vunpack.c.h.b16 %v110
    %v273 = vunpack.c.l.b16 %v111
    %v274 = vunpack.c.h.b16 %v111
    %v275 = vunpack.c.l.b16 %v112
    %v276 = vunpack.c.h.b16 %v112
    %v277 = vunpack.c.l.b16 %v113
    %v278 = vunpack.c.h.b16 %v113
    %v279 = vunpack.c.l.b16 %v114
    %v280 = vunpack.c.h.b16 %v114
    %v281 = vunpack.c.l.b16 %v115
    %v282 = vunpack.c.h.b16 %v115
    %v283 = vunpack.c.l.b16 %v116
    %v284 = vunpack.c.h.b16 %v116
    %v285 = vunpack.c.l.b16 %v117
    %v286 = vunpack.c.h.b16 %v117
    %v287 = vunpack.c.l.b16 %v118
    %v288 = vunpack.c.h.b16 %v118
    %v289 = vunpack.c.l.b16 %v119
    %v290 = vunpack.c.h.b16 %v119
    %v291 = vunpack.c.l.b16 %v120
    %v292 = vunpack.c.h.b16 %v120
    %v293 = vunpack.c.l.b16 %v121
    %v294 = vunpack.c.h.b16 %v121
    %v295 = vunpack.c.l.b16 %v122
    %v296 = vunpack.c.h.b16 %v122
    %v297 = vunpack.c.l.b16 %v123
    %v298 = vunpack.c.h.b16 %v123
    %v299 = vunpack.c.l.b16 %v124
    %v300 = vunpack.c.h.b16 %v124
    %v301 = vunpack.c.l.b16 %v125
    %v302 = vunpack.c.h.b16 %v125
    %v303 = vunpack.c.l.b16 %v126
    %v304 = vunpack.c.h.b16 %v126
    %v305 = vunpack.c.l.b16 %v127
    %v306 = vunpack.c.h.b16 %v127
    %v307 = vunpack.c.l.b16 %v128
    %v308 = vunpack.c.h.b16 %v128
    %v309 = vunpack.c.l.b16 %v129
    %v310 = vunpack.c.h.b16 %v129
    %v311 = vunpack.c.l.b16 %v130
    %v312 = vunpack.c.h.b16 %v130
    %v313 = vunpack.c.l.b16 %v131
    %v314 = vunpack.c.h.b16 %v131
    %v315 = vunpack.c.l.b16 %v132
    %v316 = vunpack.c.h.b16 %v132
    %v317 = vunpack.c.l.b16 %v133
    %v318 = vunpack.c.h.b16 %v133
    %v319 = vunpack.c.l.b16 %v134
    %v320 = vunpack.c.h.b16 %v134
    %v321 = vunpack.c.l.b16 %v135
    %v322 = vunpack.c.h.b16 %v135
    %v323 = vunpack.c.l.b16 %v136
    %v324 = vunpack.c.h.b16 %v136
    %v325 = vunpack.c.l.b16 %v137
    %v326 = vunpack.c.h.b16 %v137
    %v327 = vunpack.c.l.b16 %v138
    %v328 = vunpack.c.h.b16 %v138
    %v329 = vunpack.c.l.b16 %v139
    %v330 = vunpack.c.h.b16 %v139
    %v331 = vunpack.c.l.b16 %v140
    %v332 = vunpack.c.h.b16 %v140
    %v333 = vunpack.c.l.b16 %v141
    %v334 = vunpack.c.h.b16 %v141
    %v335 = vunpack.c.l.b16 %v142
    %v336 = vunpack.c.h.b16 %v142
    %v337 = vunpack.c.l.b16 %v143
    %v338 = vunpack.c.h.b16 %v143
    %v339 = vunpack.c.l.b16 %v144
    %v340 = vunpack.c.h.b16 %v144
    %v341 = vunpack.c.l.b16 %v145
    %v342 = vunpack.c.h.b16 %v145
    %v343 = vunpack.c.l.b16 %v146
    %v344 = vunpack.c.h.b16 %v146
    %v345 = vunpack.c.l.b16 %v147
    %v346 = vunpack.c.h.b16 %v147
    %v347 = vunpack.c.l.b16 %v148
    %v348 = vunpack.c.h.b16 %v148
    %v349 = vunpack.c.l.b16 %v149
    %v350 = vunpack.c.h.b16 %v149
    %v351 = vunpack.c.l.b16 %v150
    %v352 = vunpack.c.h.b16 %v150
    %v353 = vunpack.c.l.b16 %v151
    %v354 = vunpack.c.h.b16 %v151
    %v355 = vunpack.c.l.b16 %v152
    %v356 = vunpack.c.h.b16 %v152
    %v357 = vpack.c.b16 %v231, %v229
    %v358 = vpack.c.b16 %v232, %v230
    %v359 = vpack.c.b16 %v235, %v233
    %v360 = vpack.c.b16 %v236, %v234
    %v361 = vpack.c.b16 %v239, %v237
    %v362 = vpack.c.b16 %v240, %v238
    %v363 = vpack.c.b16 %v243, %v241
    %v364 = vpack.c.b16 %v244, %v242
    %v365 = vpack.c.b16 %v247, %v245
    %v366 = vpack.c.b16 %v248, %v246
    %v367 = vpack.c.b16 %v251, %v249
    %v368 = vpack.c.b16 %v252, %v250
    %v369 = vpack.c.b16 %v255, %v253
    %v370 = vpack.c.b16 %v256, %v254
    %v371 = vpack.c.b16 %v259, %v257
    %v372 = vpack.c.b16 %v260, %v258
    %v373 = vpack.c.b16 %v263, %v261
    %v374 = vpack.c.b16 %v264, %v262
    %v375 = vpack.c.b16 %v267, %v265
    %v376 = vpack.c.b16 %v268, %v266
    %v377 = vpack.c.b16 %v271, %v269
    %v378 = vpack.c.b16 %v272, %v270
    %v379 = vpack.c.b16 %v275, %v273
    %v380 = vpack.c.b16 %v276, %v274
    %v381 = vpack.c.b16 %v279, %v277
    %v382 = vpack.c.b16 %v280, %v278
    %v383 = vpack.c.b16 %v283, %v281
    %v384 = vpack.c.b16 %v284, %v282
    %v385 = vpack.c.b16 %v287, %v285
    %v386 = vpack.c.b16 %v288, %v286
    %v387 = vpack.c.b16 %v291, %v289
    %v388 = vpack.c.b16 %v292, %v290
    %v389 = vpack.c.b16 %v295, %v293
    %v390 = vpack.c.b16 %v296, %v294
    %v391 = vpack.c.b16 %v299, %v297
    %v392 = vpack.c.b16 %v300, %v298
    %v393 = vpack.c.b16 %v303, %v301
    %v394 = vpack.c.b16 %v304, %v302
    %v395 = vpack.c.b16 %v307, %v305
    %v396 = vpack.c.b16 %v308, %v306
    %v397 = vpack.c.b16 %v311, %v309
    %v398 = vpack.c.b16 %v312, %v310
    %v399 = vpack.c.b16 %v315, %v313
    %v400 = vpack.c.b16 %v316, %v314
    %v401 = vpack.c.b16 %v319, %v317
    %v402 = vpack.c.b16 %v320, %v318
    %v403 = vpack.c.b16 %v323, %v321
    %v404 = vpack.c.b16 %v324, %v322
    %v405 = vpack.c.b16 %v327, %v325
    %v406 = vpack.c.b16 %v328, %v326
    %v407 = vpack.c.b16 %v331, %v329
    %v408 = vpack.c.b16 %v332, %v330
    %v409 = vpack.c.b16 %v335, %v333
    %v410 = vpack.c.b16 %v336, %v334
    %v411 = vpack.c.b16 %v339, %v337
    %v412 = vpack.c.b16 %v340, %v338
    %v413 = vpack.c.b16 %v343, %v341
    %v414 = vpack.c.b16 %v344, %v342
    %v415 = vpack.c.b16 %v347, %v345
    %v416 = vpack.c.b16 %v348, %v346
    %v417 = vpack.c.b16 %v351, %v349
    %v418 = vpack.c.b16 %v352, %v350
    %v419 = vpack.c.b16 %v355, %v353
    %v420 = vpack.c.b16 %v356, %v354
    %485 = vmatprep.subr.bf16.mxu0 %v358
    %486 = vmatpush1.bf16.msra.mxu0 %v357
    %487 = vmatprep.subr.bf16.mxu0 %v360
    %488 = vmatpush1.bf16.msra.mxu0 %v359
    %489 = vmatprep.subr.bf16.mxu0 %v362
    %490 = vmatpush1.bf16.msra.mxu0 %v361
    %491 = vmatprep.subr.bf16.mxu0 %v364
    %492 = vmatpush1.bf16.msra.mxu0 %v363
    %493 = vmatprep.subr.bf16.mxu0 %v366
    %494 = vmatpush1.bf16.msra.mxu0 %v365
    %495 = vmatprep.subr.bf16.mxu0 %v368
    %496 = vmatpush1.bf16.msra.mxu0 %v367
    %497 = vmatprep.subr.bf16.mxu0 %v370
    %498 = vmatpush1.bf16.msra.mxu0 %v369
    %499 = vmatprep.subr.bf16.mxu0 %v372
    %500 = vmatpush1.bf16.msra.mxu0 %v371
    %501 = vmatprep.subr.bf16.mxu0 %v374
    %502 = vmatpush1.bf16.msra.mxu0 %v373
    %503 = vmatprep.subr.bf16.mxu0 %v376
    %504 = vmatpush1.bf16.msra.mxu0 %v375
    %505 = vmatprep.subr.bf16.mxu0 %v378
    %506 = vmatpush1.bf16.msra.mxu0 %v377
    %507 = vmatprep.subr.bf16.mxu0 %v380
    %508 = vmatpush1.bf16.msra.mxu0 %v379
    %509 = vmatprep.subr.bf16.mxu0 %v382
    %510 = vmatpush1.bf16.msra.mxu0 %v381
    %511 = vmatprep.subr.bf16.mxu0 %v384
    %512 = vmatpush1.bf16.msra.mxu0 %v383
    %513 = vmatprep.subr.bf16.mxu0 %v386
    %514 = vmatpush1.bf16.msra.mxu0 %v385
    %515 = vmatprep.subr.bf16.mxu0 %v388
    %516 = vmatpush1.bf16.msra.mxu0 %v387
    %517 = vmatprep.mubr.bf16.mxu0 %v86
    %518 = vmatmul.mubr.bf16.gmra.mrb[0].mxu0 %v85
    %v519 = vpop.f32.mrb[0].mxu0
    %v520 = vadd.f32 %v158, %v519
    %v521 = vpop.f32.mrb[0].mxu0
    %v522 = vadd.f32 %v162, %v521
    %v523 = vpop.f32.mrb[0].mxu0
    %v524 = vpop.f32.mrb[0].mxu0
    %525 = vdwg.mxu0
    %526 = vmatprep.subr.bf16.mxu0 %v390
    %527 = vmatpush1.bf16.msra.mxu0 %v389
    %528 = vmatprep.subr.bf16.mxu0 %v392
    %529 = vmatpush1.bf16.msra.mxu0 %v391
    %530 = vmatprep.subr.bf16.mxu0 %v394
    %531 = vmatpush1.bf16.msra.mxu0 %v393
    %532 = vmatprep.subr.bf16.mxu0 %v396
    %533 = vmatpush1.bf16.msra.mxu0 %v395
    %534 = vmatprep.subr.bf16.mxu0 %v398
    %535 = vmatpush1.bf16.msra.mxu0 %v397
    %536 = vmatprep.subr.bf16.mxu0 %v400
    %537 = vmatpush1.bf16.msra.mxu0 %v399
    %538 = vmatprep.subr.bf16.mxu0 %v402
    %539 = vmatpush1.bf16.msra.mxu0 %v401
    %540 = vmatprep.subr.bf16.mxu0 %v404
    %541 = vmatpush1.bf16.msra.mxu0 %v403
    %542 = vmatprep.subr.bf16.mxu0 %v406
    %543 = vmatpush1.bf16.msra.mxu0 %v405
    %544 = vmatprep.subr.bf16.mxu0 %v408
    %545 = vmatpush1.bf16.msra.mxu0 %v407
    %546 = vmatprep.subr.bf16.mxu0 %v410
    %547 = vmatpush1.bf16.msra.mxu0 %v409
    %548 = vmatprep.subr.bf16.mxu0 %v412
    %549 = vmatpush1.bf16.msra.mxu0 %v411
    %550 = vmatprep.subr.bf16.mxu0 %v414
    %551 = vmatpush1.bf16.msra.mxu0 %v413
    %552 = vmatprep.subr.bf16.mxu0 %v416
    %553 = vmatpush1.bf16.msra.mxu0 %v415
    %554 = vmatprep.subr.bf16.mxu0 %v418
    %555 = vmatpush1.bf16.msra.mxu0 %v417
    %556 = vmatprep.subr.bf16.mxu0 %v420
    %557 = vmatpush1.bf16.msra.mxu0 %v419
    %558 = vmatprep.mubr.bf16.mxu0 %v88
    %559 = vmatmul.mubr.bf16.gmra.mrb[0].mxu0 %v87
    %v560 = vpop.f32.mrb[0].mxu0
    %v561 = vadd.f32 %v520, %v560
    %v562 = vpop.f32.mrb[0].mxu0
    %v563 = vadd.f32 %v522, %v562
    %v564 = vpop.f32.mrb[0].mxu0
    %v565 = vpop.f32.mrb[0].mxu0
    %566 = vdwg.mxu0
    %v567 = vmax.f32 %v561, 0.0
    %v568 = vmax.f32 %v563, 0.0
    %v569 = vpack.c.bf16 %v567, %v567
    %v570 = vpack.c.bf16 %v568, %v568
    %v571 = vld [vmem:[#allocation7] sm:$0xff]
    %v572 = vld [vmem:[#allocation7 + $0x8] sm:$0xff]
    %v573 = vld [vmem:[#allocation7 + $0x10] sm:$0xff]
    %v574 = vld [vmem:[#allocation7 + $0x18] sm:$0xff]
    %v575 = vld [vmem:[#allocation7 + $0x20] sm:$0xff]
    %v576 = vld [vmem:[#allocation7 + $0x28] sm:$0xff]
    %v577 = vld [vmem:[#allocation7 + $0x30] sm:$0xff]
    %v578 = vld [vmem:[#allocation7 + $0x38] sm:$0xff]
    %v579 = vld [vmem:[#allocation7 + $0x40] sm:$0xff]
    %v580 = vld [vmem:[#allocation7 + $0x48] sm:$0xff]
    %v581 = vld [vmem:[#allocation7 + $0x50] sm:$0xff]
    %v582 = vld [vmem:[#allocation7 + $0x58] sm:$0xff]
    %v583 = vld [vmem:[#allocation7 + $0x60] sm:$0xff]
    %v584 = vld [vmem:[#allocation7 + $0x68] sm:$0xff]
    %v585 = vld [vmem:[#allocation7 + $0x70] sm:$0xff]
    %v586 = vld [vmem:[#allocation7 + $0x78] sm:$0xff]
    %v587 = vld [vmem:[#allocation7 + $0x80] sm:$0xff]
    %v588 = vld [vmem:[#allocation7 + $0x88] sm:$0xff]
    %v589 = vld [vmem:[#allocation7 + $0x90] sm:$0xff]
    %v590 = vld [vmem:[#allocation7 + $0x98] sm:$0xff]
    %v591 = vld [vmem:[#allocation7 + $0xa0] sm:$0xff]
    %v592 = vld [vmem:[#allocation7 + $0xa8] sm:$0xff]
    %v593 = vld [vmem:[#allocation7 + $0xb0] sm:$0xff]
    %v594 = vld [vmem:[#allocation7 + $0xb8] sm:$0xff]
    %v595 = vld [vmem:[#allocation7 + $0xc0] sm:$0xff]
    %v596 = vld [vmem:[#allocation7 + $0xc8] sm:$0xff]
    %v597 = vld [vmem:[#allocation7 + $0xd0] sm:$0xff]
    %v598 = vld [vmem:[#allocation7 + $0xd8] sm:$0xff]
    %v599 = vld [vmem:[#allocation7 + $0xe0] sm:$0xff]
    %v600 = vld [vmem:[#allocation7 + $0xe8] sm:$0xff]
    %v601 = vld [vmem:[#allocation7 + $0xf0] sm:$0xff]
    %v602 = vld [vmem:[#allocation7 + $0xf8] sm:$0xff]
    %v603 = vld [vmem:[%s4] sm:$0x3]
    %v605 = vlaneseq
    %v606 = vshrl.u32 %v605, 7
    %v607 = vsub.s32 0, %v606
    %v608 = vrot.slane %v603, %v607
    %v609 = vlaneseq
    %v610 = vshrl.u32 %v609, 7
    %v611 = vsub.s32 1, %v610
    %v612 = vrot.slane %v603, %v611
    %v647 = vunpack.c.l.b16 %v571
    %v648 = vunpack.c.h.b16 %v571
    %v649 = vunpack.c.l.b16 %v572
    %v650 = vunpack.c.h.b16 %v572
    %v651 = vunpack.c.l.b16 %v573
    %v652 = vunpack.c.h.b16 %v573
    %v653 = vunpack.c.l.b16 %v574
    %v654 = vunpack.c.h.b16 %v574
    %v655 = vunpack.c.l.b16 %v575
    %v656 = vunpack.c.h.b16 %v575
    %v657 = vunpack.c.l.b16 %v576
    %v658 = vunpack.c.h.b16 %v576
    %v659 = vunpack.c.l.b16 %v577
    %v660 = vunpack.c.h.b16 %v577
    %v661 = vunpack.c.l.b16 %v578
    %v662 = vunpack.c.h.b16 %v578
    %v663 = vunpack.c.l.b16 %v579
    %v664 = vunpack.c.h.b16 %v579
    %v665 = vunpack.c.l.b16 %v580
    %v666 = vunpack.c.h.b16 %v580
    %v667 = vunpack.c.l.b16 %v581
    %v668 = vunpack.c.h.b16 %v581
    %v669 = vunpack.c.l.b16 %v582
    %v670 = vunpack.c.h.b16 %v582
    %v671 = vunpack.c.l.b16 %v583
    %v672 = vunpack.c.h.b16 %v583
    %v673 = vunpack.c.l.b16 %v584
    %v674 = vunpack.c.h.b16 %v584
    %v675 = vunpack.c.l.b16 %v585
    %v676 = vunpack.c.h.b16 %v585
    %v677 = vunpack.c.l.b16 %v586
    %v678 = vunpack.c.h.b16 %v586
    %v679 = vunpack.c.l.b16 %v587
    %v680 = vunpack.c.h.b16 %v587
    %v681 = vunpack.c.l.b16 %v588
    %v682 = vunpack.c.h.b16 %v588
    %v683 = vunpack.c.l.b16 %v589
    %v684 = vunpack.c.h.b16 %v589
    %v685 = vunpack.c.l.b16 %v590
    %v686 = vunpack.c.h.b16 %v590
    %v687 = vunpack.c.l.b16 %v591
    %v688 = vunpack.c.h.b16 %v591
    %v689 = vunpack.c.l.b16 %v592
    %v690 = vunpack.c.h.b16 %v592
    %v691 = vunpack.c.l.b16 %v593
    %v692 = vunpack.c.h.b16 %v593
    %v693 = vunpack.c.l.b16 %v594
    %v694 = vunpack.c.h.b16 %v594
    %v695 = vunpack.c.l.b16 %v595
    %v696 = vunpack.c.h.b16 %v595
    %v697 = vunpack.c.l.b16 %v596
    %v698 = vunpack.c.h.b16 %v596
    %v699 = vunpack.c.l.b16 %v597
    %v700 = vunpack.c.h.b16 %v597
    %v701 = vunpack.c.l.b16 %v598
    %v702 = vunpack.c.h.b16 %v598
    %v703 = vunpack.c.l.b16 %v599
    %v704 = vunpack.c.h.b16 %v599
    %v705 = vunpack.c.l.b16 %v600
    %v706 = vunpack.c.h.b16 %v600
    %v707 = vunpack.c.l.b16 %v601
    %v708 = vunpack.c.h.b16 %v601
    %v709 = vunpack.c.l.b16 %v602
    %v710 = vunpack.c.h.b16 %v602
    %v711 = vpack.c.b16 %v649, %v647
    %v712 = vpack.c.b16 %v650, %v648
    %v713 = vpack.c.b16 %v653, %v651
    %v714 = vpack.c.b16 %v654, %v652
    %v715 = vpack.c.b16 %v657, %v655
    %v716 = vpack.c.b16 %v658, %v656
    %v717 = vpack.c.b16 %v661, %v659
    %v718 = vpack.c.b16 %v662, %v660
    %v719 = vpack.c.b16 %v665, %v663
    %v720 = vpack.c.b16 %v666, %v664
    %v721 = vpack.c.b16 %v669, %v667
    %v722 = vpack.c.b16 %v670, %v668
    %v723 = vpack.c.b16 %v673, %v671
    %v724 = vpack.c.b16 %v674, %v672
    %v725 = vpack.c.b16 %v677, %v675
    %v726 = vpack.c.b16 %v678, %v676
    %v727 = vpack.c.b16 %v681, %v679
    %v728 = vpack.c.b16 %v682, %v680
    %v729 = vpack.c.b16 %v685, %v683
    %v730 = vpack.c.b16 %v686, %v684
    %v731 = vpack.c.b16 %v689, %v687
    %v732 = vpack.c.b16 %v690, %v688
    %v733 = vpack.c.b16 %v693, %v691
    %v734 = vpack.c.b16 %v694, %v692
    %v735 = vpack.c.b16 %v697, %v695
    %v736 = vpack.c.b16 %v698, %v696
    %v737 = vpack.c.b16 %v701, %v699
    %v738 = vpack.c.b16 %v702, %v700
    %v739 = vpack.c.b16 %v705, %v703
    %v740 = vpack.c.b16 %v706, %v704
    %v741 = vpack.c.b16 %v709, %v707
    %v742 = vpack.c.b16 %v710, %v708
    %775 = vmatprep.subr.bf16.mxu0 %v712
    %776 = vmatpush1.bf16.msra.mxu0 %v711
    %777 = vmatprep.subr.bf16.mxu0 %v714
    %778 = vmatpush1.bf16.msra.mxu0 %v713
    %779 = vmatprep.subr.bf16.mxu0 %v716
    %780 = vmatpush1.bf16.msra.mxu0 %v715
    %781 = vmatprep.subr.bf16.mxu0 %v718
    %782 = vmatpush1.bf16.msra.mxu0 %v717
    %783 = vmatprep.subr.bf16.mxu0 %v720
    %784 = vmatpush1.bf16.msra.mxu0 %v719
    %785 = vmatprep.subr.bf16.mxu0 %v722
    %786 = vmatpush1.bf16.msra.mxu0 %v721
    %787 = vmatprep.subr.bf16.mxu0 %v724
    %788 = vmatpush1.bf16.msra.mxu0 %v723
    %789 = vmatprep.subr.bf16.mxu0 %v726
    %790 = vmatpush1.bf16.msra.mxu0 %v725
    %791 = vmatprep.subr.bf16.mxu0 %v728
    %792 = vmatpush1.bf16.msra.mxu0 %v727
    %793 = vmatprep.subr.bf16.mxu0 %v730
    %794 = vmatpush1.bf16.msra.mxu0 %v729
    %795 = vmatprep.subr.bf16.mxu0 %v732
    %796 = vmatpush1.bf16.msra.mxu0 %v731
    %797 = vmatprep.subr.bf16.mxu0 %v734
    %798 = vmatpush1.bf16.msra.mxu0 %v733
    %799 = vmatprep.subr.bf16.mxu0 %v736
    %800 = vmatpush1.bf16.msra.mxu0 %v735
    %801 = vmatprep.subr.bf16.mxu0 %v738
    %802 = vmatpush1.bf16.msra.mxu0 %v737
    %803 = vmatprep.subr.bf16.mxu0 %v740
    %804 = vmatpush1.bf16.msra.mxu0 %v739
    %805 = vmatprep.subr.bf16.mxu0 %v742
    %806 = vmatpush1.bf16.msra.mxu0 %v741
    %807 = vmatprep.mubr.bf16.mxu0 %v570
    %808 = vmatmul.mubr.bf16.gmra.mrb[0].mxu0 %v569
    %v809 = vpop.f32.mrb[0].mxu0
    %v810 = vadd.f32 %v608, %v809
    %v811 = vpop.f32.mrb[0].mxu0
    %v812 = vadd.f32 %v612, %v811
    %v813 = vpop.f32.mrb[0].mxu0
    %v814 = vpop.f32.mrb[0].mxu0
    %815 = vdwg.mxu0
    %v816 = vmax.f32 %v810, 0.0
    %v817 = vmax.f32 %v812, 0.0
    %v818 = vpack.c.bf16 %v816, %v816
    %v819 = vpack.c.bf16 %v817, %v817
    %v820 = vld [vmem:[#allocation8] sm:$0xf]
    %v821 = vld [vmem:[#allocation8 + $0x4] sm:$0xf]
    %v822 = vld [vmem:[#allocation8 + $0x8] sm:$0xf]
    %v823 = vld [vmem:[#allocation8 + $0xc] sm:$0xf]
    %v824 = vld [vmem:[#allocation8 + $0x10] sm:$0xf]
    %v825 = vld [vmem:[#allocation8 + $0x14] sm:$0xf]
    %v826 = vld [vmem:[#allocation8 + $0x18] sm:$0xf]
    %v827 = vld [vmem:[#allocation8 + $0x1c] sm:$0xf]
    %v828 = vld [vmem:[#allocation8 + $0x20] sm:$0xf]
    %v829 = vld [vmem:[#allocation8 + $0x24] sm:$0xf]
    %v830 = vld [vmem:[#allocation8 + $0x28] sm:$0xf]
    %v831 = vld [vmem:[#allocation8 + $0x2c] sm:$0xf]
    %v832 = vld [vmem:[#allocation8 + $0x30] sm:$0xf]
    %v833 = vld [vmem:[#allocation8 + $0x34] sm:$0xf]
    %v834 = vld [vmem:[#allocation8 + $0x38] sm:$0xf]
    %v835 = vld [vmem:[#allocation8 + $0x3c] sm:$0xf]
    %v836 = vld [vmem:[#allocation8 + $0x40] sm:$0xf]
    %v837 = vld [vmem:[#allocation8 + $0x44] sm:$0xf]
    %v838 = vld [vmem:[#allocation8 + $0x48] sm:$0xf]
    %v839 = vld [vmem:[#allocation8 + $0x4c] sm:$0xf]
    %v840 = vld [vmem:[#allocation8 + $0x50] sm:$0xf]
    %v841 = vld [vmem:[#allocation8 + $0x54] sm:$0xf]
    %v842 = vld [vmem:[#allocation8 + $0x58] sm:$0xf]
    %v843 = vld [vmem:[#allocation8 + $0x5c] sm:$0xf]
    %v844 = vld [vmem:[#allocation8 + $0x60] sm:$0xf]
    %v845 = vld [vmem:[#allocation8 + $0x64] sm:$0xf]
    %v846 = vld [vmem:[#allocation8 + $0x68] sm:$0xf]
    %v847 = vld [vmem:[#allocation8 + $0x6c] sm:$0xf]
    %v848 = vld [vmem:[#allocation8 + $0x70] sm:$0xf]
    %v849 = vld [vmem:[#allocation8 + $0x74] sm:$0xf]
    %v850 = vld [vmem:[#allocation8 + $0x78] sm:$0xf]
    %v851 = vld [vmem:[#allocation8 + $0x7c] sm:$0xf]
    %v852 = vld [vmem:[%s6] sm:$0x1]
    %v854 = vlaneseq
    %v855 = vshrl.u32 %v854, 7
    %v856 = vsub.s32 0, %v855
    %v857 = vrot.slane %v852, %v856
    %v891 = vunpack.c.l.b16 %v820
    %v892 = vunpack.c.l.b16 %v821
    %v893 = vunpack.c.l.b16 %v822
    %v894 = vunpack.c.l.b16 %v823
    %v895 = vunpack.c.l.b16 %v824
    %v896 = vunpack.c.l.b16 %v825
    %v897 = vunpack.c.l.b16 %v826
    %v898 = vunpack.c.l.b16 %v827
    %v899 = vunpack.c.l.b16 %v828
    %v900 = vunpack.c.l.b16 %v829
    %v901 = vunpack.c.l.b16 %v830
    %v902 = vunpack.c.l.b16 %v831
    %v903 = vunpack.c.l.b16 %v832
    %v904 = vunpack.c.l.b16 %v833
    %v905 = vunpack.c.l.b16 %v834
    %v906 = vunpack.c.l.b16 %v835
    %v907 = vunpack.c.l.b16 %v836
    %v908 = vunpack.c.l.b16 %v837
    %v909 = vunpack.c.l.b16 %v838
    %v910 = vunpack.c.l.b16 %v839
    %v911 = vunpack.c.l.b16 %v840
    %v912 = vunpack.c.l.b16 %v841
    %v913 = vunpack.c.l.b16 %v842
    %v914 = vunpack.c.l.b16 %v843
    %v915 = vunpack.c.l.b16 %v844
    %v916 = vunpack.c.l.b16 %v845
    %v917 = vunpack.c.l.b16 %v846
    %v918 = vunpack.c.l.b16 %v847
    %v919 = vunpack.c.l.b16 %v848
    %v920 = vunpack.c.l.b16 %v849
    %v921 = vunpack.c.l.b16 %v850
    %v922 = vunpack.c.l.b16 %v851
    %v923 = vpack.c.b16 %v892, %v891
    %v924 = vpack.c.b16 %v894, %v893
    %v925 = vpack.c.b16 %v896, %v895
    %v926 = vpack.c.b16 %v898, %v897
    %v927 = vpack.c.b16 %v900, %v899
    %v928 = vpack.c.b16 %v902, %v901
    %v929 = vpack.c.b16 %v904, %v903
    %v930 = vpack.c.b16 %v906, %v905
    %v931 = vpack.c.b16 %v908, %v907
    %v932 = vpack.c.b16 %v910, %v909
    %v933 = vpack.c.b16 %v912, %v911
    %v934 = vpack.c.b16 %v914, %v913
    %v935 = vpack.c.b16 %v916, %v915
    %v936 = vpack.c.b16 %v918, %v917
    %v937 = vpack.c.b16 %v920, %v919
    %v938 = vpack.c.b16 %v922, %v921
    %955 = vmatprep.subr.bf16.mxu0 0
    %956 = vmatpush1.bf16.msra.mxu0 %v923
    %957 = vmatprep.subr.bf16.mxu0 0
    %958 = vmatpush1.bf16.msra.mxu0 %v924
    %959 = vmatprep.subr.bf16.mxu0 0
    %960 = vmatpush1.bf16.msra.mxu0 %v925
    %961 = vmatprep.subr.bf16.mxu0 0
    %962 = vmatpush1.bf16.msra.mxu0 %v926
    %963 = vmatprep.subr.bf16.mxu0 0
    %964 = vmatpush1.bf16.msra.mxu0 %v927
    %965 = vmatprep.subr.bf16.mxu0 0
    %966 = vmatpush1.bf16.msra.mxu0 %v928
    %967 = vmatprep.subr.bf16.mxu0 0
    %968 = vmatpush1.bf16.msra.mxu0 %v929
    %969 = vmatprep.subr.bf16.mxu0 0
    %970 = vmatpush1.bf16.msra.mxu0 %v930
    %971 = vmatprep.subr.bf16.mxu0 0
    %972 = vmatpush1.bf16.msra.mxu0 %v931
    %973 = vmatprep.subr.bf16.mxu0 0
    %974 = vmatpush1.bf16.msra.mxu0 %v932
    %975 = vmatprep.subr.bf16.mxu0 0
    %976 = vmatpush1.bf16.msra.mxu0 %v933
    %977 = vmatprep.subr.bf16.mxu0 0
    %978 = vmatpush1.bf16.msra.mxu0 %v934
    %979 = vmatprep.subr.bf16.mxu0 0
    %980 = vmatpush1.bf16.msra.mxu0 %v935
    %981 = vmatprep.subr.bf16.mxu0 0
    %982 = vmatpush1.bf16.msra.mxu0 %v936
    %983 = vmatprep.subr.bf16.mxu0 0
    %984 = vmatpush1.bf16.msra.mxu0 %v937
    %985 = vmatprep.subr.bf16.mxu0 0
    %986 = vmatpush1.bf16.msra.mxu0 %v938
    %987 = vmatprep.mubr.bf16.mxu0 %v819
    %988 = vmatmul.mubr.bf16.gmra.mrb[0].mxu0 %v818
    %v989 = vpop.f32.mrb[0].mxu0
    %v990 = vadd.f32 %v857, %v989
    %v991 = vpop.f32.mrb[0].mxu0
    %v992 = vpop.f32.mrb[0].mxu0
    %v993 = vpop.f32.mrb[0].mxu0
    %994 = vdwg.mxu0
    %v995 = vlaneseq
    %v996 = vand.u32 %v995, 127
    %vm997 = vcmp.lt.s32.totalorder %v996, 10
    %vm998 = vcmp.ge.s32.totalorder %v996, 10
    %vm999 = vcmp.lt.s32.totalorder %v996, 26
    %vm1000 = vmand %vm998, %vm999
    %v1001 = vsel %vm997, 1, 0
    %vm1002 = vcmp.eq.s32.totalorder %v1001, 1
    %v1003 = vsel %vm1002, %v990, -1e+30
    %1004 = vmax.xlane.f32.xlu0 %v1003
    %v1005 = vpop.xlane.xlu0 %1004
    %v1006 = vsub.f32 %v1003, %v1005
    %v1007 = vmul.f32 %v1006, 1.442695
    %v1008 = vpow.pop %v1007
    %v1009 = vsel %vm1002, %v1008, 0.0
    %1010 = vadd.xlane.f32.xlu0 %v1009
    %v1011 = vpop.xlane.xlu0 %1010
    %v1012 = vrcp.pop %v1011
    %v1013 = vmul.f32 %v1009, %v1012
    %v1014 = vsel %vm1000, 1, 0
    %vm1015 = vcmp.eq.s32.totalorder %v1014, 1
    %v1016 = vsel %vm1015, %v990, -1e+30
    %1017 = vmax.xlane.f32.xlu0 %v1016
    %v1018 = vpop.xlane.xlu0 %1017
    %v1019 = vsub.f32 %v1016, %v1018
    %v1020 = vmul.f32 %v1019, 1.442695
    %v1021 = vpow.pop %v1020
    %v1022 = vsel %vm1015, %v1021, 0.0
    %1023 = vadd.xlane.f32.xlu0 %v1022
    %v1024 = vpop.xlane.xlu0 %1023
    %v1025 = vrcp.pop %v1024
    %v1026 = vmul.f32 %v1022, %v1025
    %v1027 = vadd.f32 %v1013, %v1026
    %1028 = vst [vmem:[#allocation10] sm:$0xff] %v1027
    // Predicated region
    $region46: #{tpu_custom_call.1} parent=1 // pred_check
      _
    $region47: #{tpu_custom_call.1} parent=1 // pred_check_branch
      %1030 = sbr.rel (0) target = $region49
    $region48: #{tpu_custom_call.1} parent=1 // pred_region
      %s1032 = ssub.s32 128, 128
      %1033 = vsyncadd [#allocation4], %s1032
      %s1035 = sshll.u32 [#allocation10], 4
      %s1036 = int_to_ptr.vmem [resolvable:$true] %s1035
      %1038 = dma.vmem_to_hbm [thread:$0]  %s1036, 128, %s7, [#allocation4]
    $region49: #{tpu_custom_call.1} parent=1 // pred_fallthru
      _
    // Predicated region
    $region50: #{tpu_custom_call.1} parent=1 // pred_check
      _
    $region51: #{tpu_custom_call.1} parent=1 // pred_check_branch
      %1040 = sbr.rel (0) target = $region53
    $region52: #{tpu_custom_call.1} parent=1 // pred_region
      %1041 = dma.done [#allocation4], 128
    $region53: #{tpu_custom_call.1} parent=1 // pred_fallthru
      _
    %1042 = vsyncpa [#allocation3], 1
    %1043 = vsyncpa [#allocation6], 1
    %1044 = vsyncpa [#allocation9], 1
    %1045 = vsyncpa [#allocation4], 1

</llo_original>
